<compile_context>
chip_gen: v7x
topology: tpu7x:2x2x1
jax: 0.10.0
libtpu: 0.0.40
codegen_flags: <defaults>
</compile_context>

<pallas_src>
import math
import functools

import jax
import jax.numpy as jnp
from jax import lax
from jax.experimental import pallas as pl
from jax.experimental.pallas import tpu as pltpu

_HID = 64                # hidden width of each MLP (actor / critic)
_FUSED = 2 * _HID        # fused hidden width = 128 lanes (actor | critic)


def _fused_actor_critic_kernel(
    state_ref,      # [TB, obs]        (tiled over batch)
    action_ref,     # [TB, act]        (tiled over batch)
    w1_ref,         # [obs, 128]       resident
    w2_ref,         # [128, 128]       resident (block-diagonal)
    w3_ref,         # [128, 128]       resident (mean cols + value col)
    bias_ref,       # [8, 128]         resident (rows 0..2 = b1, b2, b3)
    inv_var_ref,    # [1, act]         resident (1 / action_var)
    const_ref,      # [1, 1] in SMEM   -0.5*(log|Sigma| + k*log(2*pi))
    out_ref,        # [TB, 128] packed: cols[0:act)=mean, col act=value,
                    #                   col act+1 = log_prob
    *, act_dim,
):
    logp_col = act_dim + 1

    x = state_ref[...]
    b = bias_ref[...]

    # fused actor+critic MLP: 3 lane-dense 128-wide matmuls on the MXU
    h1 = jnp.tanh(jnp.dot(x, w1_ref[...],
                          preferred_element_type=jnp.float32) + b[0:1, :])
    h2 = jnp.tanh(jnp.dot(h1, w2_ref[...],
                          preferred_element_type=jnp.float32) + b[1:2, :])
    out3 = jnp.dot(h2, w3_ref[...],
                   preferred_element_type=jnp.float32) + b[2:3, :]
    # out3 columns: [0, act) = action mean, act = state value, rest = 0.

    # diagonal-Gaussian log_prob (inv_var & constant were hoisted to wrapper)
    mean = out3[:, :act_dim]
    diff = action_ref[...] - mean
    quad = jnp.sum(diff * diff * inv_var_ref[...], axis=-1, keepdims=True)
    logp = const_ref[0, 0] - 0.5 * quad                       # [TB, 1]

    # pack log_prob into its own column of the lane-dense output slab
    col = lax.broadcasted_iota(jnp.int32, out3.shape, 1)
    out_ref[...] = jnp.where(col == logp_col, logp, out3)


def pack_params(params, act_dim):
    """One-time packing of the 12 Linear weights/biases into 4 fused slabs."""
    f32 = jnp.float32
    w1 = jnp.concatenate([params["w1a"], params["w1c"]], axis=1).astype(f32)

    w2 = jnp.zeros((_FUSED, _FUSED), f32)
    w2 = w2.at[:_HID, :_HID].set(params["w2a"])
    w2 = w2.at[_HID:, _HID:].set(params["w2c"])

    w3 = jnp.zeros((_FUSED, _FUSED), f32)
    w3 = w3.at[:_HID, :act_dim].set(params["w3a"])          # actor -> mean cols
    w3 = w3.at[_HID:, act_dim].set(params["w3c"][:, 0])     # critic -> value col

    bias = jnp.zeros((8, _FUSED), f32)
    bias = bias.at[0, :_HID].set(params["b1a"]).at[0, _HID:].set(params["b1c"])
    bias = bias.at[1, :_HID].set(params["b2a"]).at[1, _HID:].set(params["b2c"])
    bias = bias.at[2, :act_dim].set(params["b3a"]).at[2, act_dim].set(params["b3c"][0])

    return {"w1": w1, "w2": w2, "w3": w3, "bias": bias}


def actor_critic_evaluate(state, action, packed, action_var, *, block_b=512):
    """Pallas-backed ActorCritic.evaluate (continuous actions).

    Returns (action_logprobs [B], state_values [B,1], dist_entropy [B]).
    Note: at tiny B the fixed pallas_call/DMA overhead dominates; this path is
    meant for the large-batch PPO update.
    """
    f32 = jnp.float32
    act_dim = int(action_var.shape[-1])
    assert act_dim + 2 <= _FUSED, "act_dim too large for packed output slab"

    state = state.astype(f32)
    action = action.reshape(-1, act_dim).astype(f32)   # mirrors torch act_dim==1 reshape
    B, obs_dim = state.shape

    # ---- loop-invariant scalars hoisted out of the kernel ----
    action_var = action_var.astype(f32)
    inv_var = (1.0 / action_var).reshape(1, act_dim)
    sum_log_var = jnp.sum(jnp.log(action_var))
    log_2pi = math.log(2.0 * math.pi)
    const = (-0.5 * (sum_log_var + act_dim * log_2pi)).reshape(1, 1).astype(f32)

    # ---- batch tiling: biggest tile that fits comfortably in VMEM ----
    # Per step (double buffered): 2*(TILE_B*(obs+act+128)*4B) + ~140 KiB weights
    # -> ~0.7 MiB at TILE_B=512, far under the v7x 64 MiB / 32 MiB scoped limit.
    tile_b = max(8, min(block_b, B))
    tile_b = -(-tile_b // 8) * 8                       # multiple of 8 sublanes
    padded_b = pl.cdiv(B, tile_b) * tile_b
    if padded_b != B:
        pad = padded_b - B
        state = jnp.pad(state, ((0, pad), (0, 0)))
        action = jnp.pad(action, ((0, pad), (0, 0)))

    grid = (padded_b // tile_b,)
    kernel = functools.partial(_fused_actor_critic_kernel, act_dim=act_dim)

    def batch_spec(width):
        return pl.BlockSpec((tile_b, width), lambda i: (i, 0))

    def resident(shape):   # weights stay in VMEM, never re-DMA'd across steps
        return pl.BlockSpec(shape, lambda i: (0, 0))

    packed_out = pl.pallas_call(
        kernel,
        out_shape=jax.ShapeDtypeStruct((padded_b, _FUSED), f32),
        grid=grid,
        in_specs=[
            batch_spec(obs_dim),                          # state (pipelined)
            batch_spec(act_dim),                          # action (pipelined)
            resident((obs_dim, _FUSED)),                  # w1
            resident((_FUSED, _FUSED)),                   # w2
            resident((_FUSED, _FUSED)),                   # w3
            resident((8, _FUSED)),                        # bias slab
            resident((1, act_dim)),                       # inv_var
            pl.BlockSpec(memory_space=pltpu.MemorySpace.SMEM),   # scalar const
        ],
        out_specs=pl.BlockSpec((tile_b, _FUSED), lambda i: (i, 0)),
        compiler_params=pltpu.CompilerParams(
            dimension_semantics=("parallel",),            # shard across v7x's 2 TCs
            vmem_limit_bytes=32 * 1024 * 1024,
        ),
    )(state, action, packed["w1"], packed["w2"], packed["w3"],
      packed["bias"], inv_var, const)

    logp = packed_out[:B, act_dim + 1]
    value = packed_out[:B, act_dim:act_dim + 1]
    # entropy of a fixed-covariance Gaussian is a per-batch constant
    ent = jnp.broadcast_to(0.5 * act_dim * (1.0 + log_2pi) + 0.5 * sum_log_var, (B,))
    return logp, value, ent


def init_params(key, obs_dim, act_dim):
    """Deterministic PyTorch-nn.Linear-style init (U(-1/sqrt(fan_in), ...))."""
    def linear(k, fan_in, fan_out):
        kw, kb = jax.random.split(k)
        bound = 1.0 / math.sqrt(fan_in)
        w = jax.random.uniform(kw, (fan_in, fan_out), jnp.float32, -bound, bound)
        b = jax.random.uniform(kb, (fan_out,), jnp.float32, -bound, bound)
        return w, b

    keys = jax.random.split(key, 6)
    p = {}
    p["w1a"], p["b1a"] = linear(keys[0], obs_dim, _HID)
    p["w2a"], p["b2a"] = linear(keys[1], _HID, _HID)
    p["w3a"], p["b3a"] = linear(keys[2], _HID, act_dim)
    p["w1c"], p["b1c"] = linear(keys[3], obs_dim, _HID)
    p["w2c"], p["b2c"] = linear(keys[4], _HID, _HID)
    p["w3c"], p["b3c"] = linear(keys[5], _HID, 1)
    return p


def _reference_evaluate(state, action, params, action_var):
    """Pure-JAX reference (mirrors torch semantics)."""
    h = jnp.tanh(state @ params["w1a"] + params["b1a"])
    h = jnp.tanh(h @ params["w2a"] + params["b2a"])
    mean = h @ params["w3a"] + params["b3a"]

    hc = jnp.tanh(state @ params["w1c"] + params["b1c"])
    hc = jnp.tanh(hc @ params["w2c"] + params["b2c"])
    value = hc @ params["w3c"] + params["b3c"]

    act_dim = mean.shape[-1]
    diff = action - mean
    quad = jnp.sum(diff * diff / action_var, axis=-1)
    sum_log_var = jnp.sum(jnp.log(action_var))
    logp = -0.5 * (quad + sum_log_var + act_dim * math.log(2.0 * math.pi))
    ent = jnp.full((state.shape[0],),
                   0.5 * act_dim * (1.0 + math.log(2.0 * math.pi))
                   + 0.5 * sum_log_var)
    return logp, value, ent


if __name__ == "__main__":
    B, OBS_DIM, ACT_DIM = 50, 16, 4          # small, with a non-divisible batch
    ACTION_STD_INIT = 0.6

    key = jax.random.PRNGKey(0)
    k_params, k_state, k_action = jax.random.split(key, 3)

    params = init_params(k_params, OBS_DIM, ACT_DIM)
    packed = pack_params(params, ACT_DIM)
    action_var = jnp.full((ACT_DIM,), ACTION_STD_INIT * ACTION_STD_INIT, jnp.float32)

    state = jax.random.normal(k_state, (B, OBS_DIM), jnp.float32)
    action = jax.random.normal(k_action, (B, ACT_DIM), jnp.float32)

    # block_b=16 -> several grid steps even at this small demo batch
    logp, value, ent = jax.block_until_ready(
        actor_critic_evaluate(state, action, packed, action_var, block_b=16)
    )

    # sanity check against a pure-JAX reference
    r_logp, r_value, r_ent = _reference_evaluate(state, action, params, action_var)
    assert logp.shape == (B,) and value.shape == (B, 1) and ent.shape == (B,)
    assert jnp.allclose(logp, r_logp, atol=1e-4), "log_prob mismatch"
    assert jnp.allclose(value, r_value, atol=1e-4), "value mismatch"
    assert jnp.allclose(ent, r_ent, atol=1e-4), "entropy mismatch"

    print("KERNEL_OK")
</pallas_src>

<mosaic_0001>
module attributes {stable_mosaic.version = 11 : i64} {
  func.func @_fused_actor_critic_kernel(%arg0: i32, %arg1: memref<16x16xf32, #tpu.memory_space<vmem>>, %arg2: memref<16x4xf32, #tpu.memory_space<vmem>>, %arg3: memref<16x128xf32, #tpu.memory_space<vmem>>, %arg4: memref<128x128xf32, #tpu.memory_space<vmem>>, %arg5: memref<128x128xf32, #tpu.memory_space<vmem>>, %arg6: memref<8x128xf32, #tpu.memory_space<vmem>>, %arg7: memref<1x4xf32, #tpu.memory_space<vmem>>, %arg8: memref<1x1xf32, #tpu.memory_space<smem>>, %arg9: memref<16x128xf32, #tpu.memory_space<vmem>>) attributes {dimension_semantics = [#tpu.dimension_semantics<parallel>], iteration_bounds = array<i64: 4>, scalar_prefetch = 0 : i64, scratch_operands = 0 : i64, tpu.core_type = #tpu.core_type<tc>, window_params = [{transform_indices = @transform_0, window_bounds = array<i64: 16, 16>}, {transform_indices = @transform_1, window_bounds = array<i64: 16, 4>}, {pipeline_mode = #tpu.pipeline_mode<synchronous>, transform_indices = @transform_2, window_bounds = array<i64: 16, 128>}, {pipeline_mode = #tpu.pipeline_mode<synchronous>, transform_indices = @transform_3, window_bounds = array<i64: 128, 128>}, {pipeline_mode = #tpu.pipeline_mode<synchronous>, transform_indices = @transform_4, window_bounds = array<i64: 128, 128>}, {pipeline_mode = #tpu.pipeline_mode<synchronous>, transform_indices = @transform_5, window_bounds = array<i64: 8, 128>}, {pipeline_mode = #tpu.pipeline_mode<synchronous>, transform_indices = @transform_6, window_bounds = array<i64: 1, 4>}, {transform_indices = @transform_7, window_bounds = array<i64: 1, 1>}, {transform_indices = @transform_8, window_bounds = array<i64: 16, 128>}]} {
    %c0 = arith.constant 0 : index
    %c0_0 = arith.constant 0 : index
    %0 = vector.load %arg1[%c0, %c0_0] : memref<16x16xf32, #tpu.memory_space<vmem>>, vector<16x16xf32>
    %c0_1 = arith.constant 0 : index
    %c0_2 = arith.constant 0 : index
    %1 = vector.load %arg6[%c0_1, %c0_2] : memref<8x128xf32, #tpu.memory_space<vmem>>, vector<8x128xf32>
    %c0_3 = arith.constant 0 : index
    %c0_4 = arith.constant 0 : index
    %2 = vector.load %arg3[%c0_3, %c0_4] : memref<16x128xf32, #tpu.memory_space<vmem>>, vector<16x128xf32>
    %cst = arith.constant dense<0.000000e+00> : vector<16x128xf32>
    %3 = tpu.matmul %0, %2, %cst {dimension_numbers = #tpu.dot_dimension_numbers<[1], [0], [0], [1], [0, 0, 1, 1], [], []>} : vector<16x16xf32>, vector<16x128xf32>, vector<16x128xf32> -> vector<16x128xf32>
    %4 = vector.extract_strided_slice %1 {offsets = [0, 0], sizes = [1, 128], strides = [1, 1]} : vector<8x128xf32> to vector<1x128xf32>
    %5 = vector.broadcast %4 : vector<1x128xf32> to vector<16x128xf32>
    %6 = arith.addf %3, %5 : vector<16x128xf32>
    %7 = math.tanh %6 : vector<16x128xf32>
    %c0_5 = arith.constant 0 : index
    %c0_6 = arith.constant 0 : index
    %8 = vector.load %arg4[%c0_5, %c0_6] : memref<128x128xf32, #tpu.memory_space<vmem>>, vector<128x128xf32>
    %cst_7 = arith.constant dense<0.000000e+00> : vector<16x128xf32>
    %9 = tpu.matmul %7, %8, %cst_7 {dimension_numbers = #tpu.dot_dimension_numbers<[1], [0], [0], [1], [0, 0, 1, 1], [], []>} : vector<16x128xf32>, vector<128x128xf32>, vector<16x128xf32> -> vector<16x128xf32>
    %10 = vector.extract_strided_slice %1 {offsets = [1, 0], sizes = [1, 128], strides = [1, 1]} : vector<8x128xf32> to vector<1x128xf32>
    %11 = vector.broadcast %10 : vector<1x128xf32> to vector<16x128xf32>
    %12 = arith.addf %9, %11 : vector<16x128xf32>
    %13 = math.tanh %12 : vector<16x128xf32>
    %c0_8 = arith.constant 0 : index
    %c0_9 = arith.constant 0 : index
    %14 = vector.load %arg5[%c0_8, %c0_9] : memref<128x128xf32, #tpu.memory_space<vmem>>, vector<128x128xf32>
    %cst_10 = arith.constant dense<0.000000e+00> : vector<16x128xf32>
    %15 = tpu.matmul %13, %14, %cst_10 {dimension_numbers = #tpu.dot_dimension_numbers<[1], [0], [0], [1], [0, 0, 1, 1], [], []>} : vector<16x128xf32>, vector<128x128xf32>, vector<16x128xf32> -> vector<16x128xf32>
    %16 = vector.extract_strided_slice %1 {offsets = [2, 0], sizes = [1, 128], strides = [1, 1]} : vector<8x128xf32> to vector<1x128xf32>
    %17 = vector.broadcast %16 : vector<1x128xf32> to vector<16x128xf32>
    %18 = arith.addf %15, %17 : vector<16x128xf32>
    %19 = vector.extract_strided_slice %18 {offsets = [0, 0], sizes = [16, 4], strides = [1, 1]} : vector<16x128xf32> to vector<16x4xf32>
    %c0_11 = arith.constant 0 : index
    %c0_12 = arith.constant 0 : index
    %20 = vector.load %arg2[%c0_11, %c0_12] : memref<16x4xf32, #tpu.memory_space<vmem>>, vector<16x4xf32>
    %21 = arith.subf %20, %19 : vector<16x4xf32>
    %22 = arith.mulf %21, %21 : vector<16x4xf32>
    %c0_13 = arith.constant 0 : index
    %c0_14 = arith.constant 0 : index
    %23 = vector.load %arg7[%c0_13, %c0_14] : memref<1x4xf32, #tpu.memory_space<vmem>>, vector<1x4xf32>
    %24 = vector.broadcast %23 : vector<1x4xf32> to vector<16x4xf32>
    %25 = arith.mulf %22, %24 : vector<16x4xf32>
    %cst_15 = arith.constant dense<0.000000e+00> : vector<16xf32>
    %26 = vector.multi_reduction <add>, %25, %cst_15 [1] : vector<16x4xf32> to vector<16xf32>
    %27 = vector.shape_cast %26 : vector<16xf32> to vector<16x1xf32>
    %c0_16 = arith.constant 0 : index
    %c0_17 = arith.constant 0 : index
    %28 = memref.load %arg8[%c0_16, %c0_17] : memref<1x1xf32, #tpu.memory_space<smem>>
    %cst_18 = arith.constant 5.000000e-01 : f32
    %29 = vector.broadcast %cst_18 : f32 to vector<16x1xf32>
    %30 = arith.mulf %29, %27 : vector<16x1xf32>
    %31 = vector.broadcast %28 : f32 to vector<16x1xf32>
    %32 = arith.subf %31, %30 : vector<16x1xf32>
    %33 = tpu.iota {dimensions = array<i32: 1>} : vector<16x128xi32>
    %c5_i32 = arith.constant 5 : i32
    %34 = vector.broadcast %c5_i32 : i32 to vector<16x128xi32>
    %35 = arith.cmpi eq, %33, %34 : vector<16x128xi32>
    %36 = vector.shape_cast %32 : vector<16x1xf32> to vector<16x1xf32>
    %37 = vector.broadcast %36 : vector<16x1xf32> to vector<16x128xf32>
    %38 = arith.select %35, %37, %18 : vector<16x128xi1>, vector<16x128xf32>
    %c0_19 = arith.constant 0 : index
    %c0_20 = arith.constant 0 : index
    %39 = vector.load %arg9[%c0_19, %c0_20] : memref<16x128xf32, #tpu.memory_space<vmem>>, vector<16x128xf32>
    tpu.vector_store %arg9[%c0_19, %c0_20], %38 {strides = array<i32>} : memref<16x128xf32, #tpu.memory_space<vmem>>, vector<16x128xf32>,
    return
  }
  func.func @transform_0(%arg0: i32) -> (i32, i32) {
    %c0_i32 = arith.constant 0 : i32
    %c0_i32_0 = arith.constant 0 : i32
    return %arg0, %c0_i32 : i32, i32
  }
  func.func @transform_1(%arg0: i32) -> (i32, i32) {
    %c0_i32 = arith.constant 0 : i32
    %c0_i32_0 = arith.constant 0 : i32
    return %arg0, %c0_i32 : i32, i32
  }
  func.func @transform_2(%arg0: i32) -> (i32, i32) {
    %c0_i32 = arith.constant 0 : i32
    %c0_i32_0 = arith.constant 0 : i32
    %c0_i32_1 = arith.constant 0 : i32
    return %c0_i32, %c0_i32_0 : i32, i32
  }
  func.func @transform_3(%arg0: i32) -> (i32, i32) {
    %c0_i32 = arith.constant 0 : i32
    %c0_i32_0 = arith.constant 0 : i32
    %c0_i32_1 = arith.constant 0 : i32
    return %c0_i32, %c0_i32_0 : i32, i32
  }
  func.func @transform_4(%arg0: i32) -> (i32, i32) {
    %c0_i32 = arith.constant 0 : i32
    %c0_i32_0 = arith.constant 0 : i32
    %c0_i32_1 = arith.constant 0 : i32
    return %c0_i32, %c0_i32_0 : i32, i32
  }
  func.func @transform_5(%arg0: i32) -> (i32, i32) {
    %c0_i32 = arith.constant 0 : i32
    %c0_i32_0 = arith.constant 0 : i32
    %c0_i32_1 = arith.constant 0 : i32
    return %c0_i32, %c0_i32_0 : i32, i32
  }
  func.func @transform_6(%arg0: i32) -> (i32, i32) {
    %c0_i32 = arith.constant 0 : i32
    %c0_i32_0 = arith.constant 0 : i32
    %c0_i32_1 = arith.constant 0 : i32
    return %c0_i32, %c0_i32_0 : i32, i32
  }
  func.func @transform_7(%arg0: i32) -> (i32, i32) {
    %c0_i32 = arith.constant 0 : i32
    %c0_i32_0 = arith.constant 0 : i32
    %c0_i32_1 = arith.constant 0 : i32
    return %c0_i32, %c0_i32_0 : i32, i32
  }
  func.func @transform_8(%arg0: i32) -> (i32, i32) {
    %c0_i32 = arith.constant 0 : i32
    %c0_i32_0 = arith.constant 0 : i32
    return %arg0, %c0_i32 : i32, i32
  }
}

</mosaic_0001>

<llo_original>
// kernel: tpu_custom_call.1
$region0: #{tpu_custom_call.1}
  #allocation0 [shape = 'u32[]', space=smem, size = 0x4, offset = 0x4, fixed_abs, tag = 'smem constant byte address 0x4 - core index']
  #allocation1 [shape = 'u32[144,128]{1,0:T(1,128)}', space=vmem, size = 0x12000, scoped, tag = 'internal scratch']
  #allocation2 [shape = 'f32[1,1]{1,0:T(1,128)S(6)}', space=smem, size = 0x200, scoped, tag = 'scoped memory for tpu_custom_call.1']
  %s0 = inlined_call_operand.vmem [shape: f32[64,16], index: 0, kind: input, shape index: {}]
  %s1 = inlined_call_operand.vmem [shape: f32[64,4], index: 1, kind: input, shape index: {}]
  %s2 = inlined_call_operand.vmem [shape: f32[16,128], index: 2, kind: input, shape index: {}]
  %s3 = inlined_call_operand.vmem [shape: f32[128,128], index: 3, kind: input, shape index: {}]
  %s4 = inlined_call_operand.hbm [shape: f32[128,128], index: 4, kind: input, shape index: {}]
  %s5 = inlined_call_operand.vmem [shape: f32[8,128], index: 5, kind: input, shape index: {}]
  %s6 = inlined_call_operand.vmem [shape: f32[1,4], index: 6, kind: input, shape index: {}]
  %s7 = inlined_call_operand.<no memory space> [shape: f32[1,1], index: 7, kind: input, shape index: {}]
  %s8 = inlined_call_operand.hbm [shape: f32[64,128], index: 8, kind: output, shape index: {}]
  %s9 = sld [smem:[#allocation0]]
  $region69: #{tpu_custom_call.1} parent=0
    _
  %s11 = ssub.s32 1, %s9
  %s12 = scalar_select 0, %s11, %s9
  %13 = sst [smem:[#allocation2]] %s7
  $region1: #{tpu_custom_call.1} parent=0
    #allocation3 [shape = 'u8[65536]{0}', space=vmem, size = 0x10000, scoped, tag = 'input window, operand 4, single buffered']
    #allocation4 [shape = 's32[2]{0}', space=sflag, size = 0x8, scoped, tag = 'scoped memory for tpu_custom_call.1']
    #allocation5 [shape = 's32[2]{0}', space=sflag, size = 0x8, scoped, tag = 'scoped memory for tpu_custom_call.1']
    #allocation6 [shape = 'u8[16384]{0}', space=vmem, size = 0x4000, scoped, tag = 'output window, operand 0']
    %14 = vsyncpa [#allocation4], 0
    %15 = vsyncpa [#allocation5], 0
    %s16 = scalar_lea.sflag [#allocation5], 1
    %17 = vsyncpa %s16, 0
    loop: start=0, step=1, limit=6
    $region2: #{tpu_custom_call.1} parent=1 // loop_pre_header
      _
    $region3: #{tpu_custom_call.1} parent=1 // loop_header
      %s19 = sphi 0, %s23
      %p20 = scmp.ge.s32.totalorder %s19, 6
      %s29 = sphi 0, %s31
      %s32 = sphi 0, %s29
      %s33 = sphi 0, %s32
      %s49 = sphi 0, %s33
      %s55 = sphi 0, %s57
      %s58 = sphi 0, %s55
      %s59 = sphi 0, %s58
      %s75 = sphi 0, %s59
      %s79 = sphi 0, %s79
      %s81 = sphi 0, %s79
      %s82 = sphi 0, %s81
      %s96 = sphi 0, %s82
      %s100 = sphi 0, %s100
      %s102 = sphi 0, %s100
      %s103 = sphi 0, %s102
      %s117 = sphi 0, %s103
      %s121 = sphi 0, %s121
      %s123 = sphi 0, %s121
      %s124 = sphi 0, %s123
      %s138 = sphi 0, %s124
      %s142 = sphi 0, %s142
      %s144 = sphi 0, %s142
      %s145 = sphi 0, %s144
      %s159 = sphi 0, %s145
      %s163 = sphi 0, %s163
      %s165 = sphi 0, %s163
      %s166 = sphi 0, %s165
      %s180 = sphi 0, %s166
      %s184 = sphi 0, %s184
      %s186 = sphi 0, %s184
      %s187 = sphi 0, %s186
      %s201 = sphi 0, %s187
      %s207 = sphi 0, %s209
      %s210 = sphi 0, %s207
      %s211 = sphi 0, %s210
      %s227 = sphi 0, %s211
    $region4: #{tpu_custom_call.1} parent=1 // loop_header_branch
      %22 = sbr.rel (%p20) target = $region8
    $region5: #{tpu_custom_call.1} parent=1 // loop_body
      %s24 = ssub.s32 %s19, 1
      %s25 = ssub.s32 %s19, 2
      %s26 = sadd.s32 %s19, 1
      %s27 = ssub.s32 %s19, %s26
      %p28 = scmp.eq.s32.totalorder %s27, 0
      %s30 = sadd.s32 %s29, 1
      %s31 = scalar_select %p28, %s29, %s30
      %p34 = pneg %p28
      %p35 = scmp.eq.s32.totalorder %s19, 3
      %p36 = por %p34, %p35
      %p37 = scmp.ne.s32.totalorder %s29, %s32
      %p38 = scmp.eq.s32.totalorder %s19, 0
      %p39 = por %p37, %p38
      %p40 = scmp.ne.s32.totalorder %s29, %s32
      %p41 = scmp.eq.s32.totalorder %s24, 3
      %p42 = por %p40, %p41
      %p43 = scmp.ne.s32.totalorder %s32, %s33
      %p44 = scmp.eq.s32.totalorder %s24, 0
      %p45 = por %p43, %p44
      %p46 = scmp.ne.s32.totalorder %s32, %s33
      %p47 = scmp.eq.s32.totalorder %s25, 3
      %p48 = por %p46, %p47
      %p50 = scmp.ne.s32.totalorder %s33, %s49
      %p51 = scmp.eq.s32.totalorder %s25, 0
      %p52 = por %p50, %p51
      %s53 = ssub.s32 %s19, %s26
      %p54 = scmp.eq.s32.totalorder %s53, 0
      %s56 = sadd.s32 %s55, 1
      %s57 = scalar_select %p54, %s55, %s56
      %p60 = pneg %p54
      %p61 = scmp.eq.s32.totalorder %s19, 3
      %p62 = por %p60, %p61
      %p63 = scmp.ne.s32.totalorder %s55, %s58
      %p64 = scmp.eq.s32.totalorder %s19, 0
      %p65 = por %p63, %p64
      %p66 = scmp.ne.s32.totalorder %s55, %s58
      %p67 = scmp.eq.s32.totalorder %s24, 3
      %p68 = por %p66, %p67
      %p69 = scmp.ne.s32.totalorder %s58, %s59
      %p70 = scmp.eq.s32.totalorder %s24, 0
      %p71 = por %p69, %p70
      %p72 = scmp.ne.s32.totalorder %s58, %s59
      %p73 = scmp.eq.s32.totalorder %s25, 3
      %p74 = por %p72, %p73
      %p76 = scmp.ne.s32.totalorder %s59, %s75
      %p77 = scmp.eq.s32.totalorder %s25, 0
      %p78 = por %p76, %p77
      %s80 = sadd.s32 %s79, 1
      %p83 = scmp.eq.s32.totalorder %s19, 3
      %p84 = scmp.ne.s32.totalorder %s79, %s81
      %p85 = scmp.eq.s32.totalorder %s19, 0
      %p86 = por %p84, %p85
      %p87 = scmp.ne.s32.totalorder %s79, %s81
      %p88 = scmp.eq.s32.totalorder %s24, 3
      %p89 = por %p87, %p88
      %p90 = scmp.ne.s32.totalorder %s81, %s82
      %p91 = scmp.eq.s32.totalorder %s24, 0
      %p92 = por %p90, %p91
      %p93 = scmp.ne.s32.totalorder %s81, %s82
      %p94 = scmp.eq.s32.totalorder %s25, 3
      %p95 = por %p93, %p94
      %p97 = scmp.ne.s32.totalorder %s82, %s96
      %p98 = scmp.eq.s32.totalorder %s25, 0
      %p99 = por %p97, %p98
      %s101 = sadd.s32 %s100, 1
      %p104 = scmp.eq.s32.totalorder %s19, 3
      %p105 = scmp.ne.s32.totalorder %s100, %s102
      %p106 = scmp.eq.s32.totalorder %s19, 0
      %p107 = por %p105, %p106
      %p108 = scmp.ne.s32.totalorder %s100, %s102
      %p109 = scmp.eq.s32.totalorder %s24, 3
      %p110 = por %p108, %p109
      %p111 = scmp.ne.s32.totalorder %s102, %s103
      %p112 = scmp.eq.s32.totalorder %s24, 0
      %p113 = por %p111, %p112
      %p114 = scmp.ne.s32.totalorder %s102, %s103
      %p115 = scmp.eq.s32.totalorder %s25, 3
      %p116 = por %p114, %p115
      %p118 = scmp.ne.s32.totalorder %s103, %s117
      %p119 = scmp.eq.s32.totalorder %s25, 0
      %p120 = por %p118, %p119
      %s122 = sadd.s32 %s121, 1
      %p125 = scmp.eq.s32.totalorder %s19, 3
      %p126 = scmp.ne.s32.totalorder %s121, %s123
      %p127 = scmp.eq.s32.totalorder %s19, 0
      %p128 = por %p126, %p127
      %p129 = scmp.ne.s32.totalorder %s121, %s123
      %p130 = scmp.eq.s32.totalorder %s24, 3
      %p131 = por %p129, %p130
      %p132 = scmp.ne.s32.totalorder %s123, %s124
      %p133 = scmp.eq.s32.totalorder %s24, 0
      %p134 = por %p132, %p133
      %p135 = scmp.ne.s32.totalorder %s123, %s124
      %p136 = scmp.eq.s32.totalorder %s25, 3
      %p137 = por %p135, %p136
      %p139 = scmp.ne.s32.totalorder %s124, %s138
      %p140 = scmp.eq.s32.totalorder %s25, 0
      %p141 = por %p139, %p140
      %s143 = sadd.s32 %s142, 1
      %p146 = scmp.eq.s32.totalorder %s19, 3
      %p147 = scmp.ne.s32.totalorder %s142, %s144
      %p148 = scmp.eq.s32.totalorder %s19, 0
      %p149 = por %p147, %p148
      %p150 = scmp.ne.s32.totalorder %s142, %s144
      %p151 = scmp.eq.s32.totalorder %s24, 3
      %p152 = por %p150, %p151
      %p153 = scmp.ne.s32.totalorder %s144, %s145
      %p154 = scmp.eq.s32.totalorder %s24, 0
      %p155 = por %p153, %p154
      %p156 = scmp.ne.s32.totalorder %s144, %s145
      %p157 = scmp.eq.s32.totalorder %s25, 3
      %p158 = por %p156, %p157
      %p160 = scmp.ne.s32.totalorder %s145, %s159
      %p161 = scmp.eq.s32.totalorder %s25, 0
      %p162 = por %p160, %p161
      %s164 = sadd.s32 %s163, 1
      %p167 = scmp.eq.s32.totalorder %s19, 3
      %p168 = scmp.ne.s32.totalorder %s163, %s165
      %p169 = scmp.eq.s32.totalorder %s19, 0
      %p170 = por %p168, %p169
      %p171 = scmp.ne.s32.totalorder %s163, %s165
      %p172 = scmp.eq.s32.totalorder %s24, 3
      %p173 = por %p171, %p172
      %p174 = scmp.ne.s32.totalorder %s165, %s166
      %p175 = scmp.eq.s32.totalorder %s24, 0
      %p176 = por %p174, %p175
      %p177 = scmp.ne.s32.totalorder %s165, %s166
      %p178 = scmp.eq.s32.totalorder %s25, 3
      %p179 = por %p177, %p178
      %p181 = scmp.ne.s32.totalorder %s166, %s180
      %p182 = scmp.eq.s32.totalorder %s25, 0
      %p183 = por %p181, %p182
      %s185 = sadd.s32 %s184, 1
      %p188 = scmp.eq.s32.totalorder %s19, 3
      %p189 = scmp.ne.s32.totalorder %s184, %s186
      %p190 = scmp.eq.s32.totalorder %s19, 0
      %p191 = por %p189, %p190
      %p192 = scmp.ne.s32.totalorder %s184, %s186
      %p193 = scmp.eq.s32.totalorder %s24, 3
      %p194 = por %p192, %p193
      %p195 = scmp.ne.s32.totalorder %s186, %s187
      %p196 = scmp.eq.s32.totalorder %s24, 0
      %p197 = por %p195, %p196
      %p198 = scmp.ne.s32.totalorder %s186, %s187
      %p199 = scmp.eq.s32.totalorder %s25, 3
      %p200 = por %p198, %p199
      %p202 = scmp.ne.s32.totalorder %s187, %s201
      %p203 = scmp.eq.s32.totalorder %s25, 0
      %p204 = por %p202, %p203
      %s205 = ssub.s32 %s19, %s26
      %p206 = scmp.eq.s32.totalorder %s205, 0
      %s208 = sadd.s32 %s207, 1
      %s209 = scalar_select %p206, %s207, %s208
      %p212 = pneg %p206
      %p213 = scmp.eq.s32.totalorder %s19, 3
      %p214 = por %p212, %p213
      %p215 = scmp.ne.s32.totalorder %s207, %s210
      %p216 = scmp.eq.s32.totalorder %s19, 0
      %p217 = por %p215, %p216
      %p218 = scmp.ne.s32.totalorder %s207, %s210
      %p219 = scmp.eq.s32.totalorder %s24, 3
      %p220 = por %p218, %p219
      %p221 = scmp.ne.s32.totalorder %s210, %s211
      %p222 = scmp.eq.s32.totalorder %s24, 0
      %p223 = por %p221, %p222
      %p224 = scmp.ne.s32.totalorder %s210, %s211
      %p225 = scmp.eq.s32.totalorder %s25, 3
      %p226 = por %p224, %p225
      %p228 = scmp.ne.s32.totalorder %s211, %s227
      %p229 = scmp.eq.s32.totalorder %s25, 0
      %p230 = por %p228, %p229
      %p231 = scmp.le.s32.totalorder 1, %s19
      %p232 = scmp.lt.s32.totalorder %s19, 5
      %p233 = pnand %p231, %p232
      %p234 = pneg %p233
      // Predicated region
      $region9: #{tpu_custom_call.1} parent=5 // pred_check
        _
      $region10: #{tpu_custom_call.1} parent=5 // pred_check_branch
        %236 = sbr.rel (%p233) target = $region12
      $region11: #{tpu_custom_call.1} parent=5 // pred_region
        %s237 = ssub.s32 %s19, 1
        // Predicated region
        $region13: #{tpu_custom_call.1} parent=11 // pred_check
          %p238 = pneg %p92
        $region14: #{tpu_custom_call.1} parent=11 // pred_check_branch
          %240 = sbr.rel (%p238) target = $region16
        $region15: #{tpu_custom_call.1} parent=11 // pred_region
          _
        $region16: #{tpu_custom_call.1} parent=11 // pred_fallthru
          _
        // Predicated region
        $region17: #{tpu_custom_call.1} parent=11 // pred_check
          %p241 = pneg %p113
        $region18: #{tpu_custom_call.1} parent=11 // pred_check_branch
          %243 = sbr.rel (%p241) target = $region20
        $region19: #{tpu_custom_call.1} parent=11 // pred_region
          _
        $region20: #{tpu_custom_call.1} parent=11 // pred_fallthru
          _
        // Predicated region
        $region21: #{tpu_custom_call.1} parent=11 // pred_check
          %p244 = pneg %p134
        $region22: #{tpu_custom_call.1} parent=11 // pred_check_branch
          %246 = sbr.rel (%p244) target = $region24
        $region23: #{tpu_custom_call.1} parent=11 // pred_region
          %s248 = ssub.s32 2048, 2048
          %249 = vsyncadd [#allocation4], %s248
          %s250 = sshll.u32 [#allocation3], 4
          %s251 = int_to_ptr.vmem [resolvable:$true] %s250
          %256 = dma.hbm_to_vmem [thread:$0]  %s4, 2048, %s251, [#allocation4], 128, 128, 8
        $region24: #{tpu_custom_call.1} parent=11 // pred_fallthru
          _
        // Predicated region
        $region25: #{tpu_custom_call.1} parent=11 // pred_check
          %p257 = pneg %p155
        $region26: #{tpu_custom_call.1} parent=11 // pred_check_branch
          %259 = sbr.rel (%p257) target = $region28
        $region27: #{tpu_custom_call.1} parent=11 // pred_region
          _
        $region28: #{tpu_custom_call.1} parent=11 // pred_fallthru
          _
        // Predicated region
        $region29: #{tpu_custom_call.1} parent=11 // pred_check
          %p260 = pneg %p176
        $region30: #{tpu_custom_call.1} parent=11 // pred_check_branch
          %262 = sbr.rel (%p260) target = $region32
        $region31: #{tpu_custom_call.1} parent=11 // pred_region
          _
        $region32: #{tpu_custom_call.1} parent=11 // pred_fallthru
          _
        // Predicated region
        $region33: #{tpu_custom_call.1} parent=11 // pred_check
          %p263 = pneg %p197
        $region34: #{tpu_custom_call.1} parent=11 // pred_check_branch
          %265 = sbr.rel (%p263) target = $region36
        $region35: #{tpu_custom_call.1} parent=11 // pred_region
          _
        $region36: #{tpu_custom_call.1} parent=11 // pred_fallthru
          _
      $region12: #{tpu_custom_call.1} parent=5 // pred_fallthru
        _
      %p266 = scmp.lt.s32.totalorder %s19, 4
      // Predicated region
      $region37: #{tpu_custom_call.1} parent=5 // pred_check
        %p267 = pneg %p266
      $region38: #{tpu_custom_call.1} parent=5 // pred_check_branch
        %269 = sbr.rel (%p267) target = $region40
      $region39: #{tpu_custom_call.1} parent=5 // pred_region
        // Predicated region
        $region41: #{tpu_custom_call.1} parent=39 // pred_check
          %p270 = pneg %p39
        $region42: #{tpu_custom_call.1} parent=39 // pred_check_branch
          %272 = sbr.rel (%p270) target = $region44
        $region43: #{tpu_custom_call.1} parent=39 // pred_region
          %s273 = smul.u32 2, %s19
          %p274 = scmp.lt.s32.totalorder %s273, 7
          %s275 = scalar_select %p274, %s273, 7
          %s276 = smul.addr %s275, 8
          %s277 = scalar_lea.vmem %s0, %s276
          %s278 = smul.u32 2, %s19
        $region44: #{tpu_custom_call.1} parent=39 // pred_fallthru
          _
        // Predicated region
        $region45: #{tpu_custom_call.1} parent=39 // pred_check
          %p279 = pneg %p65
        $region46: #{tpu_custom_call.1} parent=39 // pred_check_branch
          %281 = sbr.rel (%p279) target = $region48
        $region47: #{tpu_custom_call.1} parent=39 // pred_region
          %s282 = smul.u32 2, %s19
          %p283 = scmp.lt.s32.totalorder %s282, 7
          %s284 = scalar_select %p283, %s282, 7
          %s285 = smul.addr %s284, 8
          %s286 = scalar_lea.vmem %s1, %s285
          %s287 = smul.u32 2, %s19
        $region48: #{tpu_custom_call.1} parent=39 // pred_fallthru
          _
      $region40: #{tpu_custom_call.1} parent=5 // pred_fallthru
        _
      %p288 = scmp.le.s32.totalorder 1, %s19
      %p289 = scmp.lt.s32.totalorder %s19, 5
      %p290 = pnand %p288, %p289
      %p291 = pneg %p290
      // Predicated region
      $region49: #{tpu_custom_call.1} parent=5 // pred_check
        _
      $region50: #{tpu_custom_call.1} parent=5 // pred_check_branch
        %293 = sbr.rel (%p290) target = $region52
      $region51: #{tpu_custom_call.1} parent=5 // pred_region
        %s294 = ssub.s32 %s19, 1
        // Predicated region
        $region53: #{tpu_custom_call.1} parent=51 // pred_check
          %p295 = pneg %p134
        $region54: #{tpu_custom_call.1} parent=51 // pred_check_branch
          %297 = sbr.rel (%p295) target = $region56
        $region55: #{tpu_custom_call.1} parent=51 // pred_region
          %298 = dma.done [#allocation4], 2048
        $region56: #{tpu_custom_call.1} parent=51 // pred_fallthru
          _
        %s299 = smul.u32 2, %s24
        %p300 = scmp.lt.s32.totalorder %s299, 7
        %s301 = scalar_select %p300, %s299, 7
        %s302 = smul.addr %s301, 8
        %s303 = scalar_lea.vmem %s0, %s302
        %p304 = pneg %p45
        %p305 = pneg %p42
        %s306 = smul.u32 2, %s24
        %p307 = scmp.lt.s32.totalorder %s306, 7
        %s308 = scalar_select %p307, %s306, 7
        %s309 = smul.addr %s308, 8
        %s310 = scalar_lea.vmem %s1, %s309
        %p311 = pneg %p71
        %p312 = pneg %p68
        %p313 = pneg %p92
        %p314 = pneg %p89
        %p315 = pneg %p113
        %p316 = pneg %p110
        %p317 = pneg %p134
        %p318 = pneg %p131
        %p319 = pneg %p155
        %p320 = pneg %p152
        %p321 = pneg %p176
        %p322 = pneg %p173
        %p323 = pneg %p197
        %p324 = pneg %p194
        %p325 = pneg %p223
        %p326 = pneg %p220
        %s327 = sand.u32 %s210, 1
        %s328 = scalar_lea.sflag [#allocation5], %s327
        %s329 = sand.u32 %s210, 1
        %s330 = smul.addr %s329, 16
        %s331 = scalar_lea.vmem [#allocation6], %s330
        %s332 = smul.u32 2, %s24
        %p333 = scmp.lt.s32.totalorder %s332, 7
        %s334 = scalar_select %p333, %s332, 7
        %s335 = smul.addr %s334, 8
        %s336 = scalar_lea.vmem %s0, %s335
        %s337 = smul.u32 2, %s24
        %s338 = smul.u32 2, %s24
        %p339 = scmp.lt.s32.totalorder %s338, 7
        %s340 = scalar_select %p339, %s338, 7
        %s341 = smul.addr %s340, 8
        %s342 = scalar_lea.vmem %s1, %s341
        %s343 = smul.u32 2, %s24
        %s344 = smul.u32 2, %s24
        %v345 = vld [vmem:[%s336] sm:$0xff]
        %v346 = vld [vmem:[%s336 + $0x8] sm:$0xff]
        %v347 = vld [vmem:[%s5] sm:$0xff]
        %v348 = vld [vmem:[%s2] sm:$0xff]
        %v349 = vld [vmem:[%s2 + $0x8] sm:$0xff]
        %v350 = vlaneseq
        %v351 = vshrl.u32 %v350, 7
        %v352 = vsub.s32 0, %v351
        %v353 = vrot.slane %v347, %v352
        %vm354 = vcmask 130048
        %v356 = vsel %vm354, %v345, 0
        %v359 = vsel %vm354, %v346, 0
        %361 = vmatprep.subr.mxu0 0.0
        %362 = vmatpush1.msra.mxu0 %v348
        %363 = vmatprep.subr.mxu0 0.0
        %364 = vmatpush1.msra.mxu0 %v349
        %365 = vmatprep.subr.mxu0 0.0
        %366 = vmatpush1.msra.mxu0 0.0
        %367 = vmatprep.subr.mxu0 0.0
        %368 = vmatpush1.msra.mxu0 0.0
        %369 = vmatprep.subr.mxu0 0.0
        %370 = vmatpush1.msra.mxu0 0.0
        %371 = vmatprep.subr.mxu0 0.0
        %372 = vmatpush1.msra.mxu0 0.0
        %373 = vmatprep.subr.mxu0 0.0
        %374 = vmatpush1.msra.mxu0 0.0
        %375 = vmatprep.subr.mxu0 0.0
        %376 = vmatpush1.msra.mxu0 0.0
        %377 = vmatprep.subr.mxu0 0.0
        %378 = vmatpush1.msra.mxu0 0.0
        %379 = vmatprep.subr.mxu0 0.0
        %380 = vmatpush1.msra.mxu0 0.0
        %381 = vmatprep.subr.mxu0 0.0
        %382 = vmatpush1.msra.mxu0 0.0
        %383 = vmatprep.subr.mxu0 0.0
        %384 = vmatpush1.msra.mxu0 0.0
        %385 = vmatprep.subr.mxu0 0.0
        %386 = vmatpush1.msra.mxu0 0.0
        %387 = vmatprep.subr.mxu0 0.0
        %388 = vmatpush1.msra.mxu0 0.0
        %389 = vmatprep.subr.mxu0 0.0
        %390 = vmatpush1.msra.mxu0 0.0
        %391 = vmatprep.subr.mxu0 0.0
        %392 = vmatpush1.msra.mxu0 0.0
        %393 = vmatprep.subr.mxu0 0.0
        %394 = vmatpush1.msra.mxu0 0.0
        %395 = vmatprep.subr.mxu0 0.0
        %396 = vmatpush1.msra.mxu0 0.0
        %397 = vmatprep.subr.mxu0 0.0
        %398 = vmatpush1.msra.mxu0 0.0
        %399 = vmatprep.subr.mxu0 0.0
        %400 = vmatpush1.msra.mxu0 0.0
        %401 = vmatprep.subr.mxu0 0.0
        %402 = vmatpush1.msra.mxu0 0.0
        %403 = vmatprep.subr.mxu0 0.0
        %404 = vmatpush1.msra.mxu0 0.0
        %405 = vmatprep.subr.mxu0 0.0
        %406 = vmatpush1.msra.mxu0 0.0
        %407 = vmatprep.subr.mxu0 0.0
        %408 = vmatpush1.msra.mxu0 0.0
        %409 = vmatprep.subr.mxu0 0.0
        %410 = vmatpush1.msra.mxu0 0.0
        %411 = vmatprep.subr.mxu0 0.0
        %412 = vmatpush1.msra.mxu0 0.0
        %413 = vmatprep.subr.mxu0 0.0
        %414 = vmatpush1.msra.mxu0 0.0
        %415 = vmatprep.subr.mxu0 0.0
        %416 = vmatpush1.msra.mxu0 0.0
        %417 = vmatprep.subr.mxu0 0.0
        %418 = vmatpush1.msra.mxu0 0.0
        %419 = vmatprep.subr.mxu0 0.0
        %420 = vmatpush1.msra.mxu0 0.0
        %421 = vmatprep.subr.mxu0 0.0
        %422 = vmatpush1.msra.mxu0 0.0
        %423 = vmatprep.subr.mxu0 0.0
        %424 = vmatpush1.msra.mxu0 0.0
        %425 = vmatprep.mubr.f32.mxu0 0.0
        %426 = vmatmul.mubr.f32.gmra.mrb[0].mxu0 %v356
        %v427 = vpop.f32.mrb[0].mxu0
        %v428 = vadd.f32 %v353, %v427
        %v429 = vpop.f32.mrb[0].mxu0
        %430 = vmatprep.mubr.f32.mxu0 0.0
        %431 = vmatmul.mubr.f32.gmra.mrb[0].mxu0 %v359
        %v432 = vpop.f32.mrb[0].mxu0
        %v433 = vadd.f32 %v353, %v432
        %v434 = vpop.f32.mrb[0].mxu0
        %435 = vdwg.mxu0
        %v436 = vtanh.pop %v428
        %v437 = vtanh.pop %v433
        %v438 = vld [vmem:[%s3] sm:$0xff]
        %v439 = vld [vmem:[%s3 + $0x8] sm:$0xff]
        %v440 = vld [vmem:[%s3 + $0x10] sm:$0xff]
        %v441 = vld [vmem:[%s3 + $0x18] sm:$0xff]
        %v442 = vld [vmem:[%s3 + $0x20] sm:$0xff]
        %v443 = vld [vmem:[%s3 + $0x28] sm:$0xff]
        %v444 = vld [vmem:[%s3 + $0x30] sm:$0xff]
        %v445 = vld [vmem:[%s3 + $0x38] sm:$0xff]
        %v446 = vld [vmem:[%s3 + $0x40] sm:$0xff]
        %v447 = vld [vmem:[%s3 + $0x48] sm:$0xff]
        %v448 = vld [vmem:[%s3 + $0x50] sm:$0xff]
        %v449 = vld [vmem:[%s3 + $0x58] sm:$0xff]
        %v450 = vld [vmem:[%s3 + $0x60] sm:$0xff]
        %v451 = vld [vmem:[%s3 + $0x68] sm:$0xff]
        %v452 = vld [vmem:[%s3 + $0x70] sm:$0xff]
        %v453 = vld [vmem:[%s3 + $0x78] sm:$0xff]
        %v454 = vlaneseq
        %v455 = vshrl.u32 %v454, 7
        %v456 = vsub.s32 1, %v455
        %v457 = vrot.slane %v347, %v456
        %458 = vmatprep.subr.mxu0 0.0
        %459 = vmatpush1.msra.mxu0 %v438
        %460 = vmatprep.subr.mxu0 0.0
        %461 = vmatpush1.msra.mxu0 %v439
        %462 = vmatprep.subr.mxu0 0.0
        %463 = vmatpush1.msra.mxu0 %v440
        %464 = vmatprep.subr.mxu0 0.0
        %465 = vmatpush1.msra.mxu0 %v441
        %466 = vmatprep.subr.mxu0 0.0
        %467 = vmatpush1.msra.mxu0 %v442
        %468 = vmatprep.subr.mxu0 0.0
        %469 = vmatpush1.msra.mxu0 %v443
        %470 = vmatprep.subr.mxu0 0.0
        %471 = vmatpush1.msra.mxu0 %v444
        %472 = vmatprep.subr.mxu0 0.0
        %473 = vmatpush1.msra.mxu0 %v445
        %474 = vmatprep.subr.mxu0 0.0
        %475 = vmatpush1.msra.mxu0 %v446
        %476 = vmatprep.subr.mxu0 0.0
        %477 = vmatpush1.msra.mxu0 %v447
        %478 = vmatprep.subr.mxu0 0.0
        %479 = vmatpush1.msra.mxu0 %v448
        %480 = vmatprep.subr.mxu0 0.0
        %481 = vmatpush1.msra.mxu0 %v449
        %482 = vmatprep.subr.mxu0 0.0
        %483 = vmatpush1.msra.mxu0 %v450
        %484 = vmatprep.subr.mxu0 0.0
        %485 = vmatpush1.msra.mxu0 %v451
        %486 = vmatprep.subr.mxu0 0.0
        %487 = vmatpush1.msra.mxu0 %v452
        %488 = vmatprep.subr.mxu0 0.0
        %489 = vmatpush1.msra.mxu0 %v453
        %490 = vmatprep.subr.mxu0 0.0
        %491 = vmatpush1.msra.mxu0 0.0
        %492 = vmatprep.subr.mxu0 0.0
        %493 = vmatpush1.msra.mxu0 0.0
        %494 = vmatprep.subr.mxu0 0.0
        %495 = vmatpush1.msra.mxu0 0.0
        %496 = vmatprep.subr.mxu0 0.0
        %497 = vmatpush1.msra.mxu0 0.0
        %498 = vmatprep.subr.mxu0 0.0
        %499 = vmatpush1.msra.mxu0 0.0
        %500 = vmatprep.subr.mxu0 0.0
        %501 = vmatpush1.msra.mxu0 0.0
        %502 = vmatprep.subr.mxu0 0.0
        %503 = vmatpush1.msra.mxu0 0.0
        %504 = vmatprep.subr.mxu0 0.0
        %505 = vmatpush1.msra.mxu0 0.0
        %506 = vmatprep.subr.mxu0 0.0
        %507 = vmatpush1.msra.mxu0 0.0
        %508 = vmatprep.subr.mxu0 0.0
        %509 = vmatpush1.msra.mxu0 0.0
        %510 = vmatprep.subr.mxu0 0.0
        %511 = vmatpush1.msra.mxu0 0.0
        %512 = vmatprep.subr.mxu0 0.0
        %513 = vmatpush1.msra.mxu0 0.0
        %514 = vmatprep.subr.mxu0 0.0
        %515 = vmatpush1.msra.mxu0 0.0
        %516 = vmatprep.subr.mxu0 0.0
        %517 = vmatpush1.msra.mxu0 0.0
        %518 = vmatprep.subr.mxu0 0.0
        %519 = vmatpush1.msra.mxu0 0.0
        %520 = vmatprep.subr.mxu0 0.0
        %521 = vmatpush1.msra.mxu0 0.0
        %522 = vmatprep.mubr.f32.mxu0 0.0
        %523 = vmatmul.mubr.f32.gmra.mrb[0].mxu0 %v436
        %v524 = vpop.f32.mrb[0].mxu0
        %v525 = vadd.f32 %v457, %v524
        %v526 = vpop.f32.mrb[0].mxu0
        %527 = vmatprep.mubr.f32.mxu0 0.0
        %528 = vmatmul.mubr.f32.gmra.mrb[0].mxu0 %v437
        %v529 = vpop.f32.mrb[0].mxu0
        %v530 = vadd.f32 %v457, %v529
        %v531 = vpop.f32.mrb[0].mxu0
        %532 = vdwg.mxu0
        %v533 = vtanh.pop %v525
        %v534 = vtanh.pop %v530
        %v535 = vld [vmem:[#allocation3] sm:$0xff]
        %v536 = vld [vmem:[#allocation3 + $0x8] sm:$0xff]
        %v537 = vld [vmem:[#allocation3 + $0x10] sm:$0xff]
        %v538 = vld [vmem:[#allocation3 + $0x18] sm:$0xff]
        %v539 = vld [vmem:[#allocation3 + $0x20] sm:$0xff]
        %v540 = vld [vmem:[#allocation3 + $0x28] sm:$0xff]
        %v541 = vld [vmem:[#allocation3 + $0x30] sm:$0xff]
        %v542 = vld [vmem:[#allocation3 + $0x38] sm:$0xff]
        %v543 = vld [vmem:[#allocation3 + $0x40] sm:$0xff]
        %v544 = vld [vmem:[#allocation3 + $0x48] sm:$0xff]
        %v545 = vld [vmem:[#allocation3 + $0x50] sm:$0xff]
        %v546 = vld [vmem:[#allocation3 + $0x58] sm:$0xff]
        %v547 = vld [vmem:[#allocation3 + $0x60] sm:$0xff]
        %v548 = vld [vmem:[#allocation3 + $0x68] sm:$0xff]
        %v549 = vld [vmem:[#allocation3 + $0x70] sm:$0xff]
        %v550 = vld [vmem:[#allocation3 + $0x78] sm:$0xff]
        %v551 = vlaneseq
        %v552 = vshrl.u32 %v551, 7
        %v553 = vsub.s32 2, %v552
        %v554 = vrot.slane %v347, %v553
        %555 = vmatprep.subr.mxu0 0.0
        %556 = vmatpush1.msra.mxu0 %v535
        %557 = vmatprep.subr.mxu0 0.0
        %558 = vmatpush1.msra.mxu0 %v536
        %559 = vmatprep.subr.mxu0 0.0
        %560 = vmatpush1.msra.mxu0 %v537
        %561 = vmatprep.subr.mxu0 0.0
        %562 = vmatpush1.msra.mxu0 %v538
        %563 = vmatprep.subr.mxu0 0.0
        %564 = vmatpush1.msra.mxu0 %v539
        %565 = vmatprep.subr.mxu0 0.0
        %566 = vmatpush1.msra.mxu0 %v540
        %567 = vmatprep.subr.mxu0 0.0
        %568 = vmatpush1.msra.mxu0 %v541
        %569 = vmatprep.subr.mxu0 0.0
        %570 = vmatpush1.msra.mxu0 %v542
        %571 = vmatprep.subr.mxu0 0.0
        %572 = vmatpush1.msra.mxu0 %v543
        %573 = vmatprep.subr.mxu0 0.0
        %574 = vmatpush1.msra.mxu0 %v544
        %575 = vmatprep.subr.mxu0 0.0
        %576 = vmatpush1.msra.mxu0 %v545
        %577 = vmatprep.subr.mxu0 0.0
        %578 = vmatpush1.msra.mxu0 %v546
        %579 = vmatprep.subr.mxu0 0.0
        %580 = vmatpush1.msra.mxu0 %v547
        %581 = vmatprep.subr.mxu0 0.0
        %582 = vmatpush1.msra.mxu0 %v548
        %583 = vmatprep.subr.mxu0 0.0
        %584 = vmatpush1.msra.mxu0 %v549
        %585 = vmatprep.subr.mxu0 0.0
        %586 = vmatpush1.msra.mxu0 %v550
        %587 = vmatprep.subr.mxu0 0.0
        %588 = vmatpush1.msra.mxu0 0.0
        %589 = vmatprep.subr.mxu0 0.0
        %590 = vmatpush1.msra.mxu0 0.0
        %591 = vmatprep.subr.mxu0 0.0
        %592 = vmatpush1.msra.mxu0 0.0
        %593 = vmatprep.subr.mxu0 0.0
        %594 = vmatpush1.msra.mxu0 0.0
        %595 = vmatprep.subr.mxu0 0.0
        %596 = vmatpush1.msra.mxu0 0.0
        %597 = vmatprep.subr.mxu0 0.0
        %598 = vmatpush1.msra.mxu0 0.0
        %599 = vmatprep.subr.mxu0 0.0
        %600 = vmatpush1.msra.mxu0 0.0
        %601 = vmatprep.subr.mxu0 0.0
        %602 = vmatpush1.msra.mxu0 0.0
        %603 = vmatprep.subr.mxu0 0.0
        %604 = vmatpush1.msra.mxu0 0.0
        %605 = vmatprep.subr.mxu0 0.0
        %606 = vmatpush1.msra.mxu0 0.0
        %607 = vmatprep.subr.mxu0 0.0
        %608 = vmatpush1.msra.mxu0 0.0
        %609 = vmatprep.subr.mxu0 0.0
        %610 = vmatpush1.msra.mxu0 0.0
        %611 = vmatprep.subr.mxu0 0.0
        %612 = vmatpush1.msra.mxu0 0.0
        %613 = vmatprep.subr.mxu0 0.0
        %614 = vmatpush1.msra.mxu0 0.0
        %615 = vmatprep.subr.mxu0 0.0
        %616 = vmatpush1.msra.mxu0 0.0
        %617 = vmatprep.subr.mxu0 0.0
        %618 = vmatpush1.msra.mxu0 0.0
        %619 = vmatprep.mubr.f32.mxu0 0.0
        %620 = vmatmul.mubr.f32.gmra.mrb[0].mxu0 %v533
        %v621 = vpop.f32.mrb[0].mxu0
        %v622 = vadd.f32 %v554, %v621
        %v623 = vpop.f32.mrb[0].mxu0
        %624 = vmatprep.mubr.f32.mxu0 0.0
        %625 = vmatmul.mubr.f32.gmra.mrb[0].mxu0 %v534
        %v626 = vpop.f32.mrb[0].mxu0
        %v627 = vadd.f32 %v554, %v626
        %v628 = vpop.f32.mrb[0].mxu0
        %629 = vdwg.mxu0
        %v630 = vld [vmem:[%s342] sm:$0xff]
        %v631 = vld [vmem:[%s342 + $0x8] sm:$0xff]
        %v632 = vsub.f32 %v630, %v622
        %v633 = vsub.f32 %v631, %v627
        %v634 = vmul.f32 %v632, %v632
        %v635 = vmul.f32 %v633, %v633
        %v636 = vld [vmem:[%s6] sm:$0x1]
        %v638 = vlaneseq
        %v639 = vshrl.u32 %v638, 7
        %v640 = vsub.s32 0, %v639
        %v641 = vrot.slane %v636, %v640
        %v643 = vmul.f32 %v634, %v641
        %v644 = vmul.f32 %v635, %v641
        %vm645 = vcmask 31744
        %v646 = vsel %vm645, %v643, 0.0
        %647 = vadd.xlane.f32.xlu0 %v646
        %v648 = vpop.xlane.xlu0 %647
        %v649 = vsel %vm645, %v644, 0.0
        %650 = vadd.xlane.f32.xlu0 %v649
        %v651 = vpop.xlane.xlu0 %650
        %s652 = sld [smem:[#allocation2]]
        %v653 = vmul.f32 %v648, 0.5
        %v654 = vmul.f32 %v651, 0.5
        %v655 = vstv %s652
        %v656 = vsub.f32 %v655, %v653
        %v657 = vsub.f32 %v655, %v654
        %v658 = vlaneseq
        %v659 = vand.u32 %v658, 127
        %vm660 = vcmp.eq.s32.totalorder %v659, 5
        %v661 = vsel %vm660, %v656, %v622
        %v662 = vsel %vm660, %v657, %v627
        %663 = vst [vmem:[%s331] sm:$0xff] %v661
        %664 = vst [vmem:[%s331 + $0x8] sm:$0xff] %v662
        %s665 = sand.u32 %s210, 1
        %s666 = scalar_lea.sflag [#allocation5], %s665
        %s667 = sand.u32 %s210, 1
        %s668 = smul.addr %s667, 16
        %s669 = scalar_lea.vmem [#allocation6], %s668
        // Predicated region
        $region57: #{tpu_custom_call.1} parent=51 // pred_check
          %p670 = pneg %p220
        $region58: #{tpu_custom_call.1} parent=51 // pred_check_branch
          %672 = sbr.rel (%p670) target = $region60
        $region59: #{tpu_custom_call.1} parent=51 // pred_region
          %s673 = smul.u32 2, %s24
          %s675 = ssub.s32 256, 256
          %676 = vsyncadd %s666, %s675
          %s677 = smul.addr %s673, 128
          %s678 = scalar_lea.hbm %s8, %s677
          %s679 = sshll.u32 %s669, 4
          %s680 = int_to_ptr.vmem [resolvable:$true] %s679
          %685 = dma.vmem_to_hbm [thread:$0]  %s680, 256, %s678, %s666, 128, 128, 8
        $region60: #{tpu_custom_call.1} parent=51 // pred_fallthru
          _
      $region52: #{tpu_custom_call.1} parent=5 // pred_fallthru
        _
      %p686 = scmp.le.s32.totalorder 2, %s19
      // Predicated region
      $region61: #{tpu_custom_call.1} parent=5 // pred_check
        %p687 = pneg %p686
      $region62: #{tpu_custom_call.1} parent=5 // pred_check_branch
        %689 = sbr.rel (%p687) target = $region64
      $region63: #{tpu_custom_call.1} parent=5 // pred_region
        %s690 = ssub.s32 %s19, 2
        // Predicated region
        $region65: #{tpu_custom_call.1} parent=63 // pred_check
          %p691 = pneg %p226
        $region66: #{tpu_custom_call.1} parent=63 // pred_check_branch
          %693 = sbr.rel (%p691) target = $region68
        $region67: #{tpu_custom_call.1} parent=63 // pred_region
          %s694 = sand.u32 %s211, 1
          %s695 = scalar_lea.sflag [#allocation5], %s694
          %s696 = sand.u32 %s211, 1
          %s697 = smul.addr %s696, 16
          %s698 = scalar_lea.vmem [#allocation6], %s697
          %699 = dma.done %s695, 256
        $region68: #{tpu_custom_call.1} parent=63 // pred_fallthru
          _
      $region64: #{tpu_custom_call.1} parent=5 // pred_fallthru
        _
    $region6: #{tpu_custom_call.1} parent=1 // loop_footer
      %s23 = sadd.s32 1, %s19
    $region7: #{tpu_custom_call.1} parent=1 // loop_footer_branch
      %18 = sbr.rel target = $region3
    $region8: #{tpu_custom_call.1} parent=1 // loop_exit
      _
    %700 = vsyncpa [#allocation4], 1
    %s701 = scalar_lea.sflag [#allocation4], 1
    %702 = vsyncpa %s701, 1
    %703 = vsyncpa [#allocation5], 1
    %s704 = scalar_lea.sflag [#allocation5], 1
    %705 = vsyncpa %s704, 1

</llo_original>
